<compile_context>
chip_gen: v5e
topology: v5e:2x2
jax: 0.10.0
libtpu: 0.0.40
codegen_flags: <defaults>
</compile_context>

<pallas_src>
import jax
import jax.numpy as jnp
from jax.experimental import pallas as pl
from jax.experimental.pallas import tpu as pltpu


def _round_up(x, m):
    return (x + m - 1) // m * m


def bilinear_kernel(hx_ref, bl_ref, hyt_ref, out_ref, proj_ref):
    # hx_ref : (1, TM, H)  bf16   encoder tile (constant across j)
    # bl_ref : (1, H,  S)  bf16   bilinear param (resident, single-buffered)
    # hyt_ref: (1, S,  TN) bf16   decoder tile, pre-transposed to (K, N)
    # out_ref: (1, TM, TN) f32
    # proj_ref: (TM, S)    bf16   scratch: hx @ bl, cached across the j axis
    j = pl.program_id(2)

    # MXU matmul 1 (the expensive one): only when a new (b, i) tile starts.
    @pl.when(j == 0)
    def _():
        proj = jnp.dot(hx_ref[0], bl_ref[0],
                       preferred_element_type=jnp.float32)          # (TM, S) f32
        proj_ref[...] = proj.astype(jnp.bfloat16)

    # MXU matmul 2: cached projection @ h_y^T tile (RHS already in (K, N) form).
    out = jnp.dot(proj_ref[...], hyt_ref[0],
                  preferred_element_type=jnp.float32)                # (TM, TN) f32
    out_ref[0] = out.astype(out_ref.dtype)


def bilinear_score(h_x, bl, h_y, *, tm=256, tn=256, out_dtype=jnp.float32):
    """x = (h_x @ bl) @ h_y.transpose(-1, -2), batched over dim 0.

    bf16 operands, f32 MXU accumulation; the (hx @ bl) intermediate is cached
    per (batch, S_x-tile) and re-narrowed to bf16 (intentional: this is a score).
    """
    B, S_x, H = h_x.shape
    B2, S_y, S = h_y.shape
    assert B2 == B
    assert bl.shape == (1, H, S)

    h_x = h_x.astype(jnp.bfloat16)
    bl = bl.astype(jnp.bfloat16)
    # One-time HBM-side transpose so the second matmul's RHS is native (K, N):
    # avoids a per-tile XLU transpose inside the kernel.
    h_yt = jnp.swapaxes(h_y.astype(jnp.bfloat16), 1, 2)              # (B, S, S_y)

    # TM: multiple of 16 (bf16 sublane packing). TN: multiple of 128 (lane-dense
    # stores). Defaults of 256 match the v6e/v7x 256x256 MXU.
    tm = min(tm, _round_up(S_x, 16))
    tn = min(tn, _round_up(S_y, 128))
    sx_p = _round_up(S_x, tm)
    sy_p = _round_up(S_y, tn)

    if sx_p != S_x:
        h_x = jnp.pad(h_x, ((0, 0), (0, sx_p - S_x), (0, 0)))
    if sy_p != S_y:
        h_yt = jnp.pad(h_yt, ((0, 0), (0, 0), (0, sy_p - S_y)))

    # j innermost + "arbitrary" so the projection scratch is valid across S_y
    # tiles; b and i stay "parallel" (megacore sharding on v7x).
    grid = (B, sx_p // tm, sy_p // tn)

    out = pl.pallas_call(
        bilinear_kernel,
        out_shape=jax.ShapeDtypeStruct((B, sx_p, sy_p), out_dtype),
        grid_spec=pltpu.PrefetchScalarGridSpec(
            num_scalar_prefetch=0,
            grid=grid,
            in_specs=[
                # Encoder tile: varies with (b, i) only -> no re-DMA across j.
                pl.BlockSpec((1, tm, H), lambda b, i, j: (b, i, 0)),
                # Bilinear param: constant block index, single-buffered.
                pl.BlockSpec((1, H, S), lambda b, i, j: (0, 0, 0),
                             pipeline_mode=pl.Buffered(1)),
                # Decoder tile (pre-transposed): varies with (b, j) only.
                pl.BlockSpec((1, S, tn), lambda b, i, j: (b, 0, j)),
            ],
            out_specs=pl.BlockSpec((1, tm, tn), lambda b, i, j: (b, i, j)),
            scratch_shapes=[pltpu.VMEM((tm, S), jnp.bfloat16)],
        ),
        compiler_params=pltpu.CompilerParams(
            dimension_semantics=("parallel", "parallel", "arbitrary"),
            vmem_limit_bytes=32 * 1024 * 1024),
    )(h_x, bl, h_yt)

    # Strip any padding back off.
    return out[:, :S_x, :S_y]


if __name__ == "__main__":
    # Small, deterministic shapes consistent with the module's forward.
    B, S_x, S_y = 2, 8, 8
    h_dim, s_dim = 32, 32

    key = jax.random.PRNGKey(0)
    k1, k2, k3 = jax.random.split(key, 3)

    # Stand-ins for encoder/decoder last hidden states (BART itself not ported).
    h_x = jax.random.normal(k1, (B, S_x, h_dim), dtype=jnp.float32)
    h_y = jax.random.normal(k2, (B, S_y, s_dim), dtype=jnp.float32)
    # nn.Parameter(torch.FloatTensor(1, h_dim, s_dim)) -- deterministic init.
    bl = jax.random.normal(k3, (1, h_dim, s_dim), dtype=jnp.float32)

    out = bilinear_score(h_x, bl, h_y)
    out = jax.block_until_ready(out)

    # Pure-JAX reference emulating the kernel's numerics: bf16 operands, f32
    # accumulation, and the intermediate projection re-narrowed to bf16.
    hx_b = h_x.astype(jnp.bfloat16).astype(jnp.float32)
    hy_b = h_y.astype(jnp.bfloat16).astype(jnp.float32)
    bl_b = bl.astype(jnp.bfloat16).astype(jnp.float32)
    proj = jnp.einsum("bxh,hs->bxs", hx_b, bl_b[0])
    proj = proj.astype(jnp.bfloat16).astype(jnp.float32)
    ref = jnp.einsum("bxs,bys->bxy", proj, hy_b)

    assert out.shape == (B, S_x, S_y)
    assert jnp.allclose(out, ref, atol=3e-2, rtol=3e-2), (
        float(jnp.max(jnp.abs(out - ref))))

    print("KERNEL_OK")
</pallas_src>

<mosaic_0001>
module attributes {stable_mosaic.version = 11 : i64} {
  func.func @bilinear_kernel(%arg0: i32, %arg1: i32, %arg2: i32, %arg3: memref<1x16x32xbf16, #tpu.memory_space<vmem>>, %arg4: memref<1x32x32xbf16, #tpu.memory_space<vmem>>, %arg5: memref<1x32x128xbf16, #tpu.memory_space<vmem>>, %arg6: memref<1x16x128xf32, #tpu.memory_space<vmem>>, %arg7: memref<16x32xbf16, #tpu.memory_space<vmem>>) attributes {dimension_semantics = [#tpu.dimension_semantics<parallel>, #tpu.dimension_semantics<parallel>, #tpu.dimension_semantics<arbitrary>], iteration_bounds = array<i64: 2, 1, 1>, scalar_prefetch = 0 : i64, scratch_operands = 1 : i64, tpu.core_type = #tpu.core_type<tc>, window_params = [{transform_indices = @transform_0, window_bounds = array<i64: 1, 16, 32>}, {pipeline_mode = #tpu.pipeline_mode<synchronous>, transform_indices = @transform_1, window_bounds = array<i64: 1, 32, 32>}, {transform_indices = @transform_2, window_bounds = array<i64: 1, 32, 128>}, {transform_indices = @transform_3, window_bounds = array<i64: 1, 16, 128>}]} {
    %c0_i32 = arith.constant 0 : i32
    %0 = arith.cmpi eq, %arg2, %c0_i32 : i32
    %1 = arith.extui %0 : i1 to i32
    %c0_i32_0 = arith.constant 0 : i32
    %2 = arith.cmpi ne, %1, %c0_i32_0 : i32
    scf.if %2 {
      %c0_8 = arith.constant 0 : index
      %c0_9 = arith.constant 0 : index
      %c0_10 = arith.constant 0 : index
      %10 = vector.load %arg3[%c0_8, %c0_9, %c0_10] : memref<1x16x32xbf16, #tpu.memory_space<vmem>>, vector<1x16x32xbf16>
      %11 = vector.shape_cast %10 : vector<1x16x32xbf16> to vector<16x32xbf16>
      %c0_11 = arith.constant 0 : index
      %c0_12 = arith.constant 0 : index
      %c0_13 = arith.constant 0 : index
      %12 = vector.load %arg4[%c0_11, %c0_12, %c0_13] : memref<1x32x32xbf16, #tpu.memory_space<vmem>>, vector<1x32x32xbf16>
      %13 = vector.shape_cast %12 : vector<1x32x32xbf16> to vector<32x32xbf16>
      %cst_14 = arith.constant dense<0.000000e+00> : vector<16x32xf32>
      %14 = tpu.matmul %11, %13, %cst_14 {dimension_numbers = #tpu.dot_dimension_numbers<[1], [0], [0], [1], [0, 0, 1, 1], [], []>} : vector<16x32xbf16>, vector<32x32xbf16>, vector<16x32xf32> -> vector<16x32xf32>
      %15 = arith.truncf %14 : vector<16x32xf32> to vector<16x32xbf16>
      %c0_15 = arith.constant 0 : index
      %c0_16 = arith.constant 0 : index
      %16 = vector.load %arg7[%c0_15, %c0_16] : memref<16x32xbf16, #tpu.memory_space<vmem>>, vector<16x32xbf16>
      tpu.vector_store %arg7[%c0_15, %c0_16], %15 {strides = array<i32>} : memref<16x32xbf16, #tpu.memory_space<vmem>>, vector<16x32xbf16>,
    } else {
    }
    %c0 = arith.constant 0 : index
    %c0_1 = arith.constant 0 : index
    %3 = vector.load %arg7[%c0, %c0_1] : memref<16x32xbf16, #tpu.memory_space<vmem>>, vector<16x32xbf16>
    %c0_2 = arith.constant 0 : index
    %c0_3 = arith.constant 0 : index
    %c0_4 = arith.constant 0 : index
    %4 = vector.load %arg5[%c0_2, %c0_3, %c0_4] : memref<1x32x128xbf16, #tpu.memory_space<vmem>>, vector<1x32x128xbf16>
    %5 = vector.shape_cast %4 : vector<1x32x128xbf16> to vector<32x128xbf16>
    %cst = arith.constant dense<0.000000e+00> : vector<16x128xf32>
    %6 = tpu.matmul %3, %5, %cst {dimension_numbers = #tpu.dot_dimension_numbers<[1], [0], [0], [1], [0, 0, 1, 1], [], []>} : vector<16x32xbf16>, vector<32x128xbf16>, vector<16x128xf32> -> vector<16x128xf32>
    %c0_5 = arith.constant 0 : index
    %c0_6 = arith.constant 0 : index
    %c0_7 = arith.constant 0 : index
    %7 = vector.load %arg6[%c0_5, %c0_6, %c0_7] : memref<1x16x128xf32, #tpu.memory_space<vmem>>, vector<1x16x128xf32>
    %8 = vector.shape_cast %7 : vector<1x16x128xf32> to vector<16x128xf32>
    %9 = vector.shape_cast %6 : vector<16x128xf32> to vector<1x16x128xf32>
    tpu.vector_store %arg6[%c0_5, %c0_6, %c0_7], %9 {strides = array<i32>} : memref<1x16x128xf32, #tpu.memory_space<vmem>>, vector<1x16x128xf32>,
    return
  }
  func.func @transform_0(%arg0: i32, %arg1: i32, %arg2: i32) -> (i32, i32, i32) {
    %c0_i32 = arith.constant 0 : i32
    %c0_i32_0 = arith.constant 0 : i32
    return %arg0, %arg1, %c0_i32 : i32, i32, i32
  }
  func.func @transform_1(%arg0: i32, %arg1: i32, %arg2: i32) -> (i32, i32, i32) {
    %c0_i32 = arith.constant 0 : i32
    %c0_i32_0 = arith.constant 0 : i32
    %c0_i32_1 = arith.constant 0 : i32
    %c0_i32_2 = arith.constant 0 : i32
    return %c0_i32, %c0_i32_0, %c0_i32_1 : i32, i32, i32
  }
  func.func @transform_2(%arg0: i32, %arg1: i32, %arg2: i32) -> (i32, i32, i32) {
    %c0_i32 = arith.constant 0 : i32
    %c0_i32_0 = arith.constant 0 : i32
    return %arg0, %c0_i32, %arg2 : i32, i32, i32
  }
  func.func @transform_3(%arg0: i32, %arg1: i32, %arg2: i32) -> (i32, i32, i32) {
    %c0_i32 = arith.constant 0 : i32
    return %arg0, %arg1, %arg2 : i32, i32, i32
  }
}

</mosaic_0001>

<llo_original>
// kernel: tpu_custom_call.1
$region0: #{tpu_custom_call.1}
  #allocation0 [shape = 'u32[]', space=smem, size = 0x4, offset = 0x4, fixed_abs, tag = 'smem constant byte address 0x4 - core index']
  #allocation1 [shape = 'u32[72,128]{1,0:T(1,128)}', space=vmem, size = 0x9000, scoped, tag = 'internal scratch']
  #allocation2 [shape = 'bf16[16,32]{1,0:T(8,128)(2,1)}', space=vmem, size = 0x1000, scoped, tag = 'scratch operand']
  %s0 = inlined_call_operand.hbm [shape: bf16[2,16,32], index: 0, kind: input, shape index: {}]
  %s1 = inlined_call_operand.hbm [shape: bf16[1,32,32], index: 1, kind: input, shape index: {}]
  %s2 = inlined_call_operand.hbm [shape: bf16[2,32,128], index: 2, kind: input, shape index: {}]
  %s3 = inlined_call_operand.hbm [shape: f32[2,16,128], index: 3, kind: output, shape index: {}]
  %s4 = sld [smem:[#allocation0]]
  $region61: #{tpu_custom_call.1} parent=0
    _
  %s6 = ssub.s32 1, %s4
  %s7 = scalar_select 0, %s6, %s4
  $region1: #{tpu_custom_call.1} parent=0
    #allocation3 [shape = 'u8[8192]{0}', space=vmem, size = 0x2000, scoped, tag = 'input window, operand 0']
    #allocation4 [shape = 's32[2]{0}', space=sflag, size = 0x8, scoped, tag = 'scoped memory for tpu_custom_call.1']
    #allocation5 [shape = 's32[2]{0}', space=sflag, size = 0x8, scoped, tag = 'scoped memory for tpu_custom_call.1']
    #allocation6 [shape = 'u8[8192]{0}', space=vmem, size = 0x2000, scoped, tag = 'input window, operand 1, single buffered']
    #allocation7 [shape = 's32[1]{0}', space=sflag, size = 0x4, scoped, tag = 'scoped memory for tpu_custom_call.1']
    #allocation8 [shape = 'u8[16384]{0}', space=vmem, size = 0x4000, scoped, tag = 'input window, operand 2']
    #allocation9 [shape = 'u8[16384]{0}', space=vmem, size = 0x4000, scoped, tag = 'output window, operand 0']
    %8 = vsyncpa [#allocation4], 0
    %s9 = scalar_lea.sflag [#allocation4], 1
    %10 = vsyncpa %s9, 0
    %11 = vsyncpa [#allocation7], 0
    %12 = vsyncpa [#allocation5], 0
    %s13 = scalar_lea.sflag [#allocation5], 1
    %14 = vsyncpa %s13, 0
    loop: start=0, step=1, limit=4
    $region2: #{tpu_custom_call.1} parent=1 // loop_pre_header
      _
    $region3: #{tpu_custom_call.1} parent=1 // loop_header
      %s16 = sphi 0, %s20
      %p17 = scmp.ge.s32.totalorder %s16, 4
      %s23 = sphi 0, %s42
      %s24 = sphi 0, %s38
      %s25 = sphi 0, %s34
      %s26 = sphi 0, %s23
      %s27 = sphi 0, %s24
      %s28 = sphi 0, %s25
      %s29 = sphi 0, %s26
      %s30 = sphi 0, %s27
      %s31 = sphi 0, %s28
      %s47 = sphi 0, %s49
      %s50 = sphi 0, %s47
      %s51 = sphi 0, %s50
      %s67 = sphi 0, %s51
      %s71 = sphi 0, %s71
      %s73 = sphi 0, %s71
      %s74 = sphi 0, %s73
      %s88 = sphi 0, %s74
      %s96 = sphi 0, %s98
      %s99 = sphi 0, %s96
      %s100 = sphi 0, %s99
      %s116 = sphi 0, %s100
      %s126 = sphi 0, %s128
      %s129 = sphi 0, %s126
      %s130 = sphi 0, %s129
      %s146 = sphi 0, %s130
    $region4: #{tpu_custom_call.1} parent=1 // loop_header_branch
      %19 = sbr.rel (%p17) target = $region8
    $region5: #{tpu_custom_call.1} parent=1 // loop_body
      %s21 = ssub.s32 %s16, 1
      %s22 = ssub.s32 %s16, 2
      %s32 = sadd.s32 1, %s25
      %p33 = scmp.ge.s32.totalorder %s32, 1
      %s34 = scalar_select %p33, 0, %s32
      %s35 = sadd.s32 1, %s24
      %s36 = scalar_select %p33, %s35, %s24
      %p37 = scmp.ge.s32.totalorder %s36, 1
      %s38 = scalar_select %p37, 0, %s36
      %s39 = sadd.s32 1, %s23
      %s40 = scalar_select %p37, %s39, %s23
      %p41 = scmp.ge.s32.totalorder %s40, 2
      %s42 = scalar_select %p41, 0, %s40
      %s43 = ssub.s32 %s23, %s42
      %s44 = ssub.s32 %s24, %s38
      %s45 = sor.u32 %s43, %s44
      %p46 = scmp.eq.s32.totalorder %s45, 0
      %s48 = sadd.s32 %s47, 1
      %s49 = scalar_select %p46, %s47, %s48
      %p52 = pneg %p46
      %p53 = scmp.eq.s32.totalorder %s16, 1
      %p54 = por %p52, %p53
      %p55 = scmp.ne.s32.totalorder %s47, %s50
      %p56 = scmp.eq.s32.totalorder %s16, 0
      %p57 = por %p55, %p56
      %p58 = scmp.ne.s32.totalorder %s47, %s50
      %p59 = scmp.eq.s32.totalorder %s21, 1
      %p60 = por %p58, %p59
      %p61 = scmp.ne.s32.totalorder %s50, %s51
      %p62 = scmp.eq.s32.totalorder %s21, 0
      %p63 = por %p61, %p62
      %p64 = scmp.ne.s32.totalorder %s50, %s51
      %p65 = scmp.eq.s32.totalorder %s22, 1
      %p66 = por %p64, %p65
      %p68 = scmp.ne.s32.totalorder %s51, %s67
      %p69 = scmp.eq.s32.totalorder %s22, 0
      %p70 = por %p68, %p69
      %s72 = sadd.s32 %s71, 1
      %p75 = scmp.eq.s32.totalorder %s16, 1
      %p76 = scmp.ne.s32.totalorder %s71, %s73
      %p77 = scmp.eq.s32.totalorder %s16, 0
      %p78 = por %p76, %p77
      %p79 = scmp.ne.s32.totalorder %s71, %s73
      %p80 = scmp.eq.s32.totalorder %s21, 1
      %p81 = por %p79, %p80
      %p82 = scmp.ne.s32.totalorder %s73, %s74
      %p83 = scmp.eq.s32.totalorder %s21, 0
      %p84 = por %p82, %p83
      %p85 = scmp.ne.s32.totalorder %s73, %s74
      %p86 = scmp.eq.s32.totalorder %s22, 1
      %p87 = por %p85, %p86
      %p89 = scmp.ne.s32.totalorder %s74, %s88
      %p90 = scmp.eq.s32.totalorder %s22, 0
      %p91 = por %p89, %p90
      %s92 = ssub.s32 %s23, %s42
      %s93 = ssub.s32 %s25, %s34
      %s94 = sor.u32 %s92, %s93
      %p95 = scmp.eq.s32.totalorder %s94, 0
      %s97 = sadd.s32 %s96, 1
      %s98 = scalar_select %p95, %s96, %s97
      %p101 = pneg %p95
      %p102 = scmp.eq.s32.totalorder %s16, 1
      %p103 = por %p101, %p102
      %p104 = scmp.ne.s32.totalorder %s96, %s99
      %p105 = scmp.eq.s32.totalorder %s16, 0
      %p106 = por %p104, %p105
      %p107 = scmp.ne.s32.totalorder %s96, %s99
      %p108 = scmp.eq.s32.totalorder %s21, 1
      %p109 = por %p107, %p108
      %p110 = scmp.ne.s32.totalorder %s99, %s100
      %p111 = scmp.eq.s32.totalorder %s21, 0
      %p112 = por %p110, %p111
      %p113 = scmp.ne.s32.totalorder %s99, %s100
      %p114 = scmp.eq.s32.totalorder %s22, 1
      %p115 = por %p113, %p114
      %p117 = scmp.ne.s32.totalorder %s100, %s116
      %p118 = scmp.eq.s32.totalorder %s22, 0
      %p119 = por %p117, %p118
      %s120 = ssub.s32 %s23, %s42
      %s121 = ssub.s32 %s24, %s38
      %s122 = sor.u32 %s120, %s121
      %s123 = ssub.s32 %s25, %s34
      %s124 = sor.u32 %s122, %s123
      %p125 = scmp.eq.s32.totalorder %s124, 0
      %s127 = sadd.s32 %s126, 1
      %s128 = scalar_select %p125, %s126, %s127
      %p131 = pneg %p125
      %p132 = scmp.eq.s32.totalorder %s16, 1
      %p133 = por %p131, %p132
      %p134 = scmp.ne.s32.totalorder %s126, %s129
      %p135 = scmp.eq.s32.totalorder %s16, 0
      %p136 = por %p134, %p135
      %p137 = scmp.ne.s32.totalorder %s126, %s129
      %p138 = scmp.eq.s32.totalorder %s21, 1
      %p139 = por %p137, %p138
      %p140 = scmp.ne.s32.totalorder %s129, %s130
      %p141 = scmp.eq.s32.totalorder %s21, 0
      %p142 = por %p140, %p141
      %p143 = scmp.ne.s32.totalorder %s129, %s130
      %p144 = scmp.eq.s32.totalorder %s22, 1
      %p145 = por %p143, %p144
      %p147 = scmp.ne.s32.totalorder %s130, %s146
      %p148 = scmp.eq.s32.totalorder %s22, 0
      %p149 = por %p147, %p148
      %p150 = scmp.le.s32.totalorder 1, %s16
      %p151 = scmp.lt.s32.totalorder %s16, 3
      %p152 = pnand %p150, %p151
      %p153 = pneg %p152
      // Predicated region
      $region9: #{tpu_custom_call.1} parent=5 // pred_check
        _
      $region10: #{tpu_custom_call.1} parent=5 // pred_check_branch
        %155 = sbr.rel (%p152) target = $region12
      $region11: #{tpu_custom_call.1} parent=5 // pred_region
        %s156 = ssub.s32 %s16, 1
        // Predicated region
        $region13: #{tpu_custom_call.1} parent=11 // pred_check
          %p157 = pneg %p84
        $region14: #{tpu_custom_call.1} parent=11 // pred_check_branch
          %159 = sbr.rel (%p157) target = $region16
        $region15: #{tpu_custom_call.1} parent=11 // pred_region
          %161 = vsyncadd [#allocation7], 0
          %s162 = sshll.u32 %s1, 4
          %s163 = int_to_ptr.hbm [resolvable:$true] %s162
          %s164 = sshll.u32 [#allocation6], 4
          %s165 = int_to_ptr.vmem [resolvable:$true] %s164
          %170 = dma.hbm_to_vmem [thread:$0]  %s163, 256, %s165, [#allocation7], 64, 64, 4
        $region16: #{tpu_custom_call.1} parent=11 // pred_fallthru
          _
      $region12: #{tpu_custom_call.1} parent=5 // pred_fallthru
        _
      %p171 = scmp.lt.s32.totalorder %s16, 2
      // Predicated region
      $region17: #{tpu_custom_call.1} parent=5 // pred_check
        %p172 = pneg %p171
      $region18: #{tpu_custom_call.1} parent=5 // pred_check_branch
        %174 = sbr.rel (%p172) target = $region20
      $region19: #{tpu_custom_call.1} parent=5 // pred_region
        // Predicated region
        $region21: #{tpu_custom_call.1} parent=19 // pred_check
          %p175 = pneg %p57
        $region22: #{tpu_custom_call.1} parent=19 // pred_check_branch
          %177 = sbr.rel (%p175) target = $region24
        $region23: #{tpu_custom_call.1} parent=19 // pred_region
          %s178 = sand.u32 %s16, 1
          %s179 = scalar_lea.sflag [#allocation4], %s178
          %s180 = sand.u32 %s47, 1
          %s181 = smul.addr %s180, 8
          %s182 = scalar_lea.vmem [#allocation3], %s181
          %s183 = smul.u32 2, %s24
          %185 = vsyncadd %s179, 0
          %s186 = smul.addr %s23, 2
          %s187 = sadd.s32 %s183, %s186
          %s188 = smul.addr %s187, 4
          %s189 = scalar_lea.hbm %s0, %s188
          %s190 = sshll.u32 %s189, 4
          %s191 = int_to_ptr.hbm [resolvable:$true] %s190
          %s192 = sshll.u32 %s182, 4
          %s193 = int_to_ptr.vmem [resolvable:$true] %s192
          %198 = dma.hbm_to_vmem [thread:$0]  %s191, 128, %s193, %s179, 64, 64, 4
        $region24: #{tpu_custom_call.1} parent=19 // pred_fallthru
          _
        // Predicated region
        $region25: #{tpu_custom_call.1} parent=19 // pred_check
          %p199 = pneg %p106
        $region26: #{tpu_custom_call.1} parent=19 // pred_check_branch
          %201 = sbr.rel (%p199) target = $region28
        $region27: #{tpu_custom_call.1} parent=19 // pred_region
          %s202 = sand.u32 %s16, 1
          %s203 = scalar_lea.sflag [#allocation4], %s202
          %s204 = sand.u32 %s96, 1
          %s205 = smul.addr %s204, 16
          %s206 = scalar_lea.vmem [#allocation8], %s205
          %208 = vsyncadd %s203, 0
          %s209 = smul.addr %s23, 4
          %s210 = sadd.s32 %s25, %s209
          %s211 = smul.addr %s210, 4
          %s212 = scalar_lea.hbm %s2, %s211
          %s213 = sshll.u32 %s212, 4
          %s214 = int_to_ptr.hbm [resolvable:$true] %s213
          %s215 = sshll.u32 %s206, 4
          %s216 = int_to_ptr.vmem [resolvable:$true] %s215
          %221 = dma.hbm_to_vmem [thread:$0]  %s214, 256, %s216, %s203, 64, 64, 4
        $region28: #{tpu_custom_call.1} parent=19 // pred_fallthru
          _
      $region20: #{tpu_custom_call.1} parent=5 // pred_fallthru
        _
      %p222 = scmp.le.s32.totalorder 1, %s16
      %p223 = scmp.lt.s32.totalorder %s16, 3
      %p224 = pnand %p222, %p223
      %p225 = pneg %p224
      // Predicated region
      $region29: #{tpu_custom_call.1} parent=5 // pred_check
        _
      $region30: #{tpu_custom_call.1} parent=5 // pred_check_branch
        %227 = sbr.rel (%p224) target = $region32
      $region31: #{tpu_custom_call.1} parent=5 // pred_region
        %s228 = ssub.s32 %s16, 1
        %s229 = sand.u32 %s21, 1
        %s230 = scalar_lea.sflag [#allocation4], %s229
        %s231 = sand.u32 %s50, 1
        %s232 = smul.addr %s231, 8
        %s233 = scalar_lea.vmem [#allocation3], %s232
        // Predicated region
        $region33: #{tpu_custom_call.1} parent=31 // pred_check
          %p234 = pneg %p63
        $region34: #{tpu_custom_call.1} parent=31 // pred_check_branch
          %236 = sbr.rel (%p234) target = $region36
        $region35: #{tpu_custom_call.1} parent=31 // pred_region
          %238 = dma.done %s230, 128
        $region36: #{tpu_custom_call.1} parent=31 // pred_fallthru
          _
        // Predicated region
        $region37: #{tpu_custom_call.1} parent=31 // pred_check
          %p239 = pneg %p84
        $region38: #{tpu_custom_call.1} parent=31 // pred_check_branch
          %241 = sbr.rel (%p239) target = $region40
        $region39: #{tpu_custom_call.1} parent=31 // pred_region
          %243 = dma.done [#allocation7], 256
        $region40: #{tpu_custom_call.1} parent=31 // pred_fallthru
          _
        %s244 = sand.u32 %s21, 1
        %s245 = scalar_lea.sflag [#allocation4], %s244
        %s246 = sand.u32 %s99, 1
        %s247 = smul.addr %s246, 16
        %s248 = scalar_lea.vmem [#allocation8], %s247
        // Predicated region
        $region41: #{tpu_custom_call.1} parent=31 // pred_check
          %p249 = pneg %p112
        $region42: #{tpu_custom_call.1} parent=31 // pred_check_branch
          %251 = sbr.rel (%p249) target = $region44
        $region43: #{tpu_custom_call.1} parent=31 // pred_region
          %253 = dma.done %s245, 256
        $region44: #{tpu_custom_call.1} parent=31 // pred_fallthru
          _
        %s254 = sand.u32 %s21, 1
        %s255 = scalar_lea.sflag [#allocation4], %s254
        %s256 = sand.u32 %s50, 1
        %s257 = smul.addr %s256, 8
        %s258 = scalar_lea.vmem [#allocation3], %s257
        %p259 = pneg %p63
        %p260 = pneg %p60
        %p261 = pneg %p84
        %p262 = pneg %p81
        %s263 = sand.u32 %s21, 1
        %s264 = scalar_lea.sflag [#allocation4], %s263
        %s265 = sand.u32 %s99, 1
        %s266 = smul.addr %s265, 16
        %s267 = scalar_lea.vmem [#allocation8], %s266
        %p268 = pneg %p112
        %p269 = pneg %p109
        %p270 = pneg %p142
        %p271 = pneg %p139
        %s272 = sand.u32 %s129, 1
        %s273 = scalar_lea.sflag [#allocation5], %s272
        %s274 = sand.u32 %s129, 1
        %s275 = smul.addr %s274, 16
        %s276 = scalar_lea.vmem [#allocation9], %s275
        %s277 = smul.u32 2, %s27
        %s278 = smul.u32 2, %s27
        %p280 = scmp.eq.s32.totalorder %s28, 0
        // Predicated region
        $region45: #{tpu_custom_call.1} parent=31 // pred_check
          %p281 = pneg %p280
        $region46: #{tpu_custom_call.1} parent=31 // pred_check_branch
          %283 = sbr.rel (%p281) target = $region48
        $region47: #{tpu_custom_call.1} parent=31 // pred_region
          %v284 = vld [vmem:[%s233] sm:$0xf]
          %v285 = vld [vmem:[%s233 + $0x4] sm:$0xf]
          %v286 = vld [vmem:[#allocation6] sm:$0xf]
          %v287 = vld [vmem:[#allocation6 + $0x4] sm:$0xf]
          %v288 = vld [vmem:[#allocation6 + $0x8] sm:$0xf]
          %v289 = vld [vmem:[#allocation6 + $0xc] sm:$0xf]
          %v292 = vunpack.c.l.b16 %v284
          %v293 = vunpack.c.l.b16 %v285
          %v294 = vpack.c.b16 %v293, %v292
          %v299 = vunpack.c.l.b16 %v286
          %v300 = vunpack.c.l.b16 %v287
          %v301 = vunpack.c.l.b16 %v288
          %v302 = vunpack.c.l.b16 %v289
          %v303 = vpack.c.b16 %v300, %v299
          %v304 = vpack.c.b16 %v302, %v301
          %vm307 = vcmask 261120
          %v309 = vsel %vm307, %v294, 0
          %311 = vmatpush.bf16.msra.mxu0 0
          %312 = vmatpush.bf16.msra.mxu0 0
          %313 = vmatpush.bf16.msra.mxu0 0
          %314 = vmatpush.bf16.msra.mxu0 0
          %315 = vmatpush.bf16.msra.mxu0 0
          %316 = vmatpush.bf16.msra.mxu0 0
          %317 = vmatpush.bf16.msra.mxu0 %v304
          %318 = vmatpush.bf16.msra.mxu0 %v303
          %319 = vmatmul.bf16.gmra.mxu0 %v309
          %v320 = vpop.f32.mrf.mxu0
          %v321 = vadd.f32 0.0, %v320
          %v322 = vpop.f32.mrf.mxu0
          %v323 = vadd.f32 0.0, %v322
          %324 = vdwg.mxu0
          %v325 = vpack.c.bf16 %v321, %v321
          %v326 = vpack.c.bf16 %v323, %v323
          %vm327 = vcmask 257024
          %328 = vst.msk [vmem:[#allocation2] sm:$0xf] %vm327, %v325
          %329 = vst.msk [vmem:[#allocation2 + $0x4] sm:$0xf] %vm327, %v326
        $region48: #{tpu_custom_call.1} parent=31 // pred_fallthru
          _
        %v330 = vld [vmem:[#allocation2] sm:$0xf]
        %v331 = vld [vmem:[#allocation2 + $0x4] sm:$0xf]
        %v332 = vld [vmem:[%s248] sm:$0xf]
        %v333 = vld [vmem:[%s248 + $0x4] sm:$0xf]
        %v334 = vld [vmem:[%s248 + $0x8] sm:$0xf]
        %v335 = vld [vmem:[%s248 + $0xc] sm:$0xf]
        %v338 = vunpack.c.l.b16 %v330
        %v339 = vunpack.c.l.b16 %v331
        %v340 = vpack.c.b16 %v339, %v338
        %v345 = vunpack.c.l.b16 %v332
        %v346 = vunpack.c.l.b16 %v333
        %v347 = vunpack.c.l.b16 %v334
        %v348 = vunpack.c.l.b16 %v335
        %v349 = vpack.c.b16 %v346, %v345
        %v350 = vpack.c.b16 %v348, %v347
        %vm353 = vcmask 261120
        %v355 = vsel %vm353, %v340, 0
        %357 = vmatpush.bf16.msra.mxu0 0
        %358 = vmatpush.bf16.msra.mxu0 0
        %359 = vmatpush.bf16.msra.mxu0 0
        %360 = vmatpush.bf16.msra.mxu0 0
        %361 = vmatpush.bf16.msra.mxu0 0
        %362 = vmatpush.bf16.msra.mxu0 0
        %363 = vmatpush.bf16.msra.mxu0 %v350
        %364 = vmatpush.bf16.msra.mxu0 %v349
        %365 = vmatmul.bf16.gmra.mxu0 %v355
        %v366 = vpop.f32.mrf.mxu0
        %v367 = vadd.f32 0.0, %v366
        %v368 = vpop.f32.mrf.mxu0
        %v369 = vadd.f32 0.0, %v368
        %370 = vdwg.mxu0
        %371 = vst [vmem:[%s276] sm:$0xff] %v367
        %372 = vst [vmem:[%s276 + $0x8] sm:$0xff] %v369
        %s373 = sand.u32 %s129, 1
        %s374 = scalar_lea.sflag [#allocation5], %s373
        %s375 = sand.u32 %s129, 1
        %s376 = smul.addr %s375, 16
        %s377 = scalar_lea.vmem [#allocation9], %s376
        // Predicated region
        $region49: #{tpu_custom_call.1} parent=31 // pred_check
          %p378 = pneg %p139
        $region50: #{tpu_custom_call.1} parent=31 // pred_check_branch
          %380 = sbr.rel (%p378) target = $region52
        $region51: #{tpu_custom_call.1} parent=31 // pred_region
          %s381 = smul.u32 2, %s27
          %383 = vsyncadd %s374, 0
          %s384 = sadd.s32 %s28, %s381
          %s385 = smul.addr %s26, 2
          %s386 = sadd.s32 %s384, %s385
          %s387 = smul.addr %s386, 8
          %s388 = scalar_lea.hbm %s3, %s387
          %s389 = sshll.u32 %s377, 4
          %s390 = int_to_ptr.vmem [resolvable:$true] %s389
          %s391 = sshll.u32 %s388, 4
          %s392 = int_to_ptr.hbm [resolvable:$true] %s391
          %397 = dma.vmem_to_hbm [thread:$0]  %s390, 256, %s392, %s374, 128, 128, 8
        $region52: #{tpu_custom_call.1} parent=31 // pred_fallthru
          _
      $region32: #{tpu_custom_call.1} parent=5 // pred_fallthru
        _
      %p398 = scmp.le.s32.totalorder 2, %s16
      // Predicated region
      $region53: #{tpu_custom_call.1} parent=5 // pred_check
        %p399 = pneg %p398
      $region54: #{tpu_custom_call.1} parent=5 // pred_check_branch
        %401 = sbr.rel (%p399) target = $region56
      $region55: #{tpu_custom_call.1} parent=5 // pred_region
        %s402 = ssub.s32 %s16, 2
        // Predicated region
        $region57: #{tpu_custom_call.1} parent=55 // pred_check
          %p403 = pneg %p145
        $region58: #{tpu_custom_call.1} parent=55 // pred_check_branch
          %405 = sbr.rel (%p403) target = $region60
        $region59: #{tpu_custom_call.1} parent=55 // pred_region
          %s406 = sand.u32 %s130, 1
          %s407 = scalar_lea.sflag [#allocation5], %s406
          %s408 = sand.u32 %s130, 1
          %s409 = smul.addr %s408, 16
          %s410 = scalar_lea.vmem [#allocation9], %s409
          %412 = dma.done %s407, 256
        $region60: #{tpu_custom_call.1} parent=55 // pred_fallthru
          _
      $region56: #{tpu_custom_call.1} parent=5 // pred_fallthru
        _
    $region6: #{tpu_custom_call.1} parent=1 // loop_footer
      %s20 = sadd.s32 1, %s16
    $region7: #{tpu_custom_call.1} parent=1 // loop_footer_branch
      %15 = sbr.rel target = $region3
    $region8: #{tpu_custom_call.1} parent=1 // loop_exit
      _
    %413 = vsyncpa [#allocation4], 1
    %s414 = scalar_lea.sflag [#allocation4], 1
    %415 = vsyncpa %s414, 1
    %416 = vsyncpa [#allocation7], 1
    %417 = vsyncpa [#allocation5], 1
    %s418 = scalar_lea.sflag [#allocation5], 1
    %419 = vsyncpa %s418, 1

</llo_original>
